<compile_context>
chip_gen: v5e
topology: v5e:2x2
jax: 0.10.0
libtpu: 0.0.40
codegen_flags: <defaults>
</compile_context>

<pallas_src>
import functools

import jax
import jax.numpy as jnp
from jax.experimental import pallas as pl
from jax.experimental.pallas import tpu as pltpu

BN_EPS = 1e-5


def _bn_stats_kernel(x_ref, w1t_ref, sum_ref, sumsq_ref, *, valid_rows):
    """Pass 1: accumulate per-feature sum(h) and sum(h*h), h = x @ W1."""
    @pl.when(pl.program_id(0) == 0)
    def _init():
        sum_ref[...] = jnp.zeros_like(sum_ref)
        sumsq_ref[...] = jnp.zeros_like(sumsq_ref)

    block_rows = x_ref.shape[0]
    # h^T[f, n] = sum_d W1^T[f, d] * x[n, d]  -- same contraction as q @ k.T.
    h_t = jax.lax.dot_general(
        w1t_ref[...], x_ref[...],
        dimension_numbers=(((1,), (1,)), ((), ())),
        preferred_element_type=jnp.float32)              # (hidden, block_rows)

    # Mask batch lanes outside the real batch (ragged last tile / padded rows).
    row = pl.program_id(0) * block_rows + jax.lax.broadcasted_iota(
        jnp.int32, (1, block_rows), 1)
    h_t = jnp.where(row < valid_rows, h_t, 0.0)

    sum_ref[...] += jnp.sum(h_t, axis=1, keepdims=True)
    sumsq_ref[...] += jnp.sum(h_t * h_t, axis=1, keepdims=True)


def _apply_kernel(x_ref, w1t_ref, scale_ref, shift_ref, w2_ref, b2_ref, o_ref):
    """Pass 2: folded-BN affine + ReLU + Linear(10->1) + sigmoid, lane-dense out."""
    h_t = jax.lax.dot_general(
        w1t_ref[...], x_ref[...],
        dimension_numbers=(((1,), (1,)), ((), ())),
        preferred_element_type=jnp.float32)              # (hidden, block_rows)
    h_t = h_t * scale_ref[...] + shift_ref[...]          # BatchNorm (folded)
    h_t = jnp.maximum(h_t, 0.0)                          # ReLU
    # Linear(10 -> 1) as a VPU multiply + sublane reduce: result is already a
    # lane-dense (1, block_rows) row -> unmasked vector stores.
    z = jnp.sum(h_t * w2_ref[...], axis=0, keepdims=True) + b2_ref[...]
    o_ref[...] = jax.nn.sigmoid(z)                       # (1, block_rows)


def _choose_block_rows(n, d, target_tile_bytes=2 << 20, max_rows=1 << 15):
    """Largest 128-multiple row tile whose x-block stays ~target_tile_bytes."""
    rows = max(128, target_tile_bytes // (4 * d))
    rows = min(int(rows), max_rows)
    rows = max(128, (rows // 128) * 128)
    rows = min(rows, ((n + 127) // 128) * 128)   # don't overshoot tiny batches
    return int(rows)


@functools.partial(jax.jit, static_argnames=("block_rows",))
def classify_forward(x, params, *, block_rows=None):
    """x: (N, D) float32 -> (N,) float32 probabilities."""
    n, d = x.shape
    hidden = params["w1"].shape[1]

    if block_rows is None:
        block_rows = _choose_block_rows(n, d)
    if block_rows % 128:
        raise ValueError("block_rows must be a multiple of 128")

    # Pad tiny batches up to one full tile; larger ragged batches are handled
    # by the in-kernel batch mask + masked output writeback (no extra x copy).
    if n < block_rows:
        x = jnp.pad(x, ((0, block_rows - n), (0, 0)))
    n_rows = x.shape[0]
    num_tiles = pl.cdiv(n_rows, block_rows)

    w1t = params["w1"].T                                  # (hidden, D)
    # NOTE: Linear1's bias b1 is not fed to the kernels: training-mode
    # BatchNorm subtracts the batch mean, so any per-feature constant cancels.

    x_spec = pl.BlockSpec((block_rows, d), lambda i: (i, 0))

    def _full(shape):
        return pl.BlockSpec(shape, lambda *_: (0,) * len(shape))

    # ---- pass 1: global BatchNorm statistics --------------------------------
    s, ss = pl.pallas_call(
        functools.partial(_bn_stats_kernel, valid_rows=n),
        out_shape=(jax.ShapeDtypeStruct((hidden, 1), jnp.float32),
                   jax.ShapeDtypeStruct((hidden, 1), jnp.float32)),
        grid=(num_tiles,),
        in_specs=[x_spec, _full((hidden, d))],
        out_specs=(_full((hidden, 1)), _full((hidden, 1))),
        compiler_params=pltpu.CompilerParams(
            dimension_semantics=("arbitrary",)),          # accumulator axis
        cost_estimate=pl.CostEstimate(
            flops=2 * n_rows * d * hidden + 4 * n_rows * hidden,
            transcendentals=0,
            bytes_accessed=4 * n_rows * d + 4 * hidden * d + 8 * hidden),
    )(x, w1t)

    # Finalize stats + fold BN affine into a single scale/shift (tiny XLA ops).
    mean = s / n
    var = jnp.maximum(ss / n - mean * mean, 0.0)          # biased batch variance
    inv_std = jax.lax.rsqrt(var + BN_EPS)
    scale = params["gamma"].reshape(hidden, 1) * inv_std
    shift = params["beta"].reshape(hidden, 1) - mean * scale

    # ---- pass 2: normalize + ReLU + Linear(10->1) + sigmoid ------------------
    out = pl.pallas_call(
        _apply_kernel,
        out_shape=jax.ShapeDtypeStruct((1, n_rows), jnp.float32),
        grid=(num_tiles,),
        in_specs=[x_spec, _full((hidden, d)), _full((hidden, 1)),
                  _full((hidden, 1)), _full((hidden, 1)), _full((1, 1))],
        out_specs=pl.BlockSpec((1, block_rows), lambda i: (0, i)),
        compiler_params=pltpu.CompilerParams(
            dimension_semantics=("parallel",)),           # both TCs on v7x
        cost_estimate=pl.CostEstimate(
            flops=2 * n_rows * d * hidden + 6 * n_rows * hidden,
            transcendentals=n_rows,
            bytes_accessed=4 * n_rows * d + 4 * n_rows),
    )(x, w1t, scale, shift, params["w2"], params["b2"])

    return out.reshape(-1)[:n]                            # .view(-1)


def init_params(key, input_dim, hidden=10):
    """Mirror of the PyTorch module's parameters (default inits)."""
    k1, k2, k3, k4 = jax.random.split(key, 4)
    s1 = 1.0 / jnp.sqrt(jnp.float32(input_dim))
    s2 = 1.0 / jnp.sqrt(jnp.float32(hidden))
    return {
        "w1": jax.random.uniform(k1, (input_dim, hidden), jnp.float32, -s1, s1),
        "b1": jax.random.uniform(k2, (1, hidden), jnp.float32, -s1, s1),
        "gamma": jnp.ones((1, hidden), jnp.float32),
        "beta": jnp.zeros((1, hidden), jnp.float32),
        "w2": jax.random.uniform(k3, (hidden, 1), jnp.float32, -s2, s2),
        "b2": jax.random.uniform(k4, (1, 1), jnp.float32, -s2, s2),
    }


def _reference(x, params):
    """Pure-JAX replica of the PyTorch forward (training-mode BatchNorm1d)."""
    h = x @ params["w1"] + params["b1"]
    mean = h.mean(axis=0, keepdims=True)
    var = ((h - mean) ** 2).mean(axis=0, keepdims=True)
    h = (h - mean) / jnp.sqrt(var + BN_EPS) * params["gamma"] + params["beta"]
    h = jnp.maximum(h, 0.0)
    z = h @ params["w2"] + params["b2"]
    return jax.nn.sigmoid(z).reshape(-1)


if __name__ == "__main__":
    key = jax.random.PRNGKey(0)
    kx1, kx2, kp = jax.random.split(key, 3)

    D = 32
    params = init_params(kp, D)

    # Small batch: single tile, padded rows.
    x1 = jax.random.normal(kx1, (8, D), jnp.float32)
    out1 = jax.block_until_ready(classify_forward(x1, params))
    ref1 = _reference(x1, params)
    assert out1.shape == (8,)
    assert jnp.allclose(out1, ref1, atol=2e-5, rtol=1e-4)

    # Multi-tile batch with a ragged last tile: exercises cross-tile BN-stat
    # accumulation and masked boundary handling.
    x2 = jax.random.normal(kx2, (300, D), jnp.float32)
    out2 = jax.block_until_ready(classify_forward(x2, params, block_rows=128))
    ref2 = _reference(x2, params)
    assert out2.shape == (300,)
    assert jnp.allclose(out2, ref2, atol=2e-5, rtol=1e-4)

    assert bool(jnp.all((out1 >= 0.0) & (out1 <= 1.0)))
    assert bool(jnp.all((out2 >= 0.0) & (out2 <= 1.0)))
    print("KERNEL_OK")
</pallas_src>

<mosaic_0001>
module attributes {stable_mosaic.version = 11 : i64} {
  func.func @_bn_stats_kernel(%arg0: i32, %arg1: memref<128x32xf32, #tpu.memory_space<vmem>>, %arg2: memref<10x32xf32, #tpu.memory_space<vmem>>, %arg3: memref<10x1xf32, #tpu.memory_space<vmem>>, %arg4: memref<10x1xf32, #tpu.memory_space<vmem>>) attributes {dimension_semantics = [#tpu.dimension_semantics<arbitrary>], iteration_bounds = array<i64: 1>, scalar_prefetch = 0 : i64, scratch_operands = 0 : i64, tpu.core_type = #tpu.core_type<tc>, window_params = [{transform_indices = @transform_0, window_bounds = array<i64: 128, 32>}, {pipeline_mode = #tpu.pipeline_mode<synchronous>, transform_indices = @transform_1, window_bounds = array<i64: 10, 32>}, {pipeline_mode = #tpu.pipeline_mode<synchronous>, transform_indices = @transform_2, window_bounds = array<i64: 10, 1>}, {pipeline_mode = #tpu.pipeline_mode<synchronous>, transform_indices = @transform_3, window_bounds = array<i64: 10, 1>}]} {
    %c0_i32 = arith.constant 0 : i32
    %0 = arith.cmpi eq, %arg0, %c0_i32 : i32
    %1 = arith.extui %0 : i1 to i32
    %c0_i32_0 = arith.constant 0 : i32
    %2 = arith.cmpi ne, %1, %c0_i32_0 : i32
    scf.if %2 {
      %cst_15 = arith.constant 0.000000e+00 : f32
      %27 = vector.broadcast %cst_15 : f32 to vector<10x1xf32>
      %c0_16 = arith.constant 0 : index
      %c0_17 = arith.constant 0 : index
      %28 = vector.load %arg3[%c0_16, %c0_17] : memref<10x1xf32, #tpu.memory_space<vmem>>, vector<10x1xf32>
      tpu.vector_store %arg3[%c0_16, %c0_17], %27 {strides = array<i32>} : memref<10x1xf32, #tpu.memory_space<vmem>>, vector<10x1xf32>,
      %cst_18 = arith.constant 0.000000e+00 : f32
      %29 = vector.broadcast %cst_18 : f32 to vector<10x1xf32>
      %c0_19 = arith.constant 0 : index
      %c0_20 = arith.constant 0 : index
      %30 = vector.load %arg4[%c0_19, %c0_20] : memref<10x1xf32, #tpu.memory_space<vmem>>, vector<10x1xf32>
      tpu.vector_store %arg4[%c0_19, %c0_20], %29 {strides = array<i32>} : memref<10x1xf32, #tpu.memory_space<vmem>>, vector<10x1xf32>,
    } else {
    }
    %c0 = arith.constant 0 : index
    %c0_1 = arith.constant 0 : index
    %3 = vector.load %arg2[%c0, %c0_1] : memref<10x32xf32, #tpu.memory_space<vmem>>, vector<10x32xf32>
    %c0_2 = arith.constant 0 : index
    %c0_3 = arith.constant 0 : index
    %4 = vector.load %arg1[%c0_2, %c0_3] : memref<128x32xf32, #tpu.memory_space<vmem>>, vector<128x32xf32>
    %cst = arith.constant dense<0.000000e+00> : vector<10x128xf32>
    %5 = tpu.matmul %3, %4, %cst {dimension_numbers = #tpu.dot_dimension_numbers<[1], [1], [0], [0], [0, 0, 1, 0], [], []>} : vector<10x32xf32>, vector<128x32xf32>, vector<10x128xf32> -> vector<10x128xf32>
    %c128_i32 = arith.constant 128 : i32
    %6 = arith.muli %arg0, %c128_i32 : i32
    %7 = tpu.iota {dimensions = array<i32: 1>} : vector<1x128xi32>
    %8 = vector.broadcast %6 : i32 to vector<1x128xi32>
    %9 = arith.addi %8, %7 : vector<1x128xi32>
    %c8_i32 = arith.constant 8 : i32
    %10 = vector.broadcast %c8_i32 : i32 to vector<1x128xi32>
    %11 = arith.cmpi slt, %9, %10 : vector<1x128xi32>
    %cst_4 = arith.constant 0.000000e+00 : f32
    %12 = vector.shape_cast %11 : vector<1x128xi1> to vector<1x128xi1>
    %13 = vector.broadcast %12 : vector<1x128xi1> to vector<10x128xi1>
    %14 = vector.broadcast %cst_4 : f32 to vector<10x128xf32>
    %15 = arith.select %13, %5, %14 : vector<10x128xi1>, vector<10x128xf32>
    %c0_5 = arith.constant 0 : index
    %c0_6 = arith.constant 0 : index
    %16 = vector.load %arg3[%c0_5, %c0_6] : memref<10x1xf32, #tpu.memory_space<vmem>>, vector<10x1xf32>
    %cst_7 = arith.constant dense<0.000000e+00> : vector<10xf32>
    %17 = vector.multi_reduction <add>, %15, %cst_7 [1] : vector<10x128xf32> to vector<10xf32>
    %18 = vector.shape_cast %17 : vector<10xf32> to vector<10x1xf32>
    %19 = arith.addf %16, %18 : vector<10x1xf32>
    %c0_8 = arith.constant 0 : index
    %c0_9 = arith.constant 0 : index
    %20 = vector.load %arg3[%c0_8, %c0_9] : memref<10x1xf32, #tpu.memory_space<vmem>>, vector<10x1xf32>
    tpu.vector_store %arg3[%c0_8, %c0_9], %19 {strides = array<i32>} : memref<10x1xf32, #tpu.memory_space<vmem>>, vector<10x1xf32>,
    %c0_10 = arith.constant 0 : index
    %c0_11 = arith.constant 0 : index
    %21 = vector.load %arg4[%c0_10, %c0_11] : memref<10x1xf32, #tpu.memory_space<vmem>>, vector<10x1xf32>
    %22 = arith.mulf %15, %15 : vector<10x128xf32>
    %cst_12 = arith.constant dense<0.000000e+00> : vector<10xf32>
    %23 = vector.multi_reduction <add>, %22, %cst_12 [1] : vector<10x128xf32> to vector<10xf32>
    %24 = vector.shape_cast %23 : vector<10xf32> to vector<10x1xf32>
    %25 = arith.addf %21, %24 : vector<10x1xf32>
    %c0_13 = arith.constant 0 : index
    %c0_14 = arith.constant 0 : index
    %26 = vector.load %arg4[%c0_13, %c0_14] : memref<10x1xf32, #tpu.memory_space<vmem>>, vector<10x1xf32>
    tpu.vector_store %arg4[%c0_13, %c0_14], %25 {strides = array<i32>} : memref<10x1xf32, #tpu.memory_space<vmem>>, vector<10x1xf32>,
    return
  }
  func.func @transform_0(%arg0: i32) -> (i32, i32) {
    %c0_i32 = arith.constant 0 : i32
    %c0_i32_0 = arith.constant 0 : i32
    return %arg0, %c0_i32 : i32, i32
  }
  func.func @transform_1(%arg0: i32) -> (i32, i32) {
    %c0_i32 = arith.constant 0 : i32
    %c0_i32_0 = arith.constant 0 : i32
    %c0_i32_1 = arith.constant 0 : i32
    return %c0_i32, %c0_i32_0 : i32, i32
  }
  func.func @transform_2(%arg0: i32) -> (i32, i32) {
    %c0_i32 = arith.constant 0 : i32
    %c0_i32_0 = arith.constant 0 : i32
    %c0_i32_1 = arith.constant 0 : i32
    return %c0_i32, %c0_i32_0 : i32, i32
  }
  func.func @transform_3(%arg0: i32) -> (i32, i32) {
    %c0_i32 = arith.constant 0 : i32
    %c0_i32_0 = arith.constant 0 : i32
    %c0_i32_1 = arith.constant 0 : i32
    return %c0_i32, %c0_i32_0 : i32, i32
  }
}

module attributes {stable_mosaic.version = 11 : i64} {
  func.func @_apply_kernel(%arg0: i32, %arg1: memref<128x32xf32, #tpu.memory_space<vmem>>, %arg2: memref<10x32xf32, #tpu.memory_space<vmem>>, %arg3: memref<10x1xf32, #tpu.memory_space<vmem>>, %arg4: memref<10x1xf32, #tpu.memory_space<vmem>>, %arg5: memref<10x1xf32, #tpu.memory_space<vmem>>, %arg6: memref<1x1xf32, #tpu.memory_space<vmem>>, %arg7: memref<1x128xf32, #tpu.memory_space<vmem>>) attributes {dimension_semantics = [#tpu.dimension_semantics<parallel>], iteration_bounds = array<i64: 1>, scalar_prefetch = 0 : i64, scratch_operands = 0 : i64, tpu.core_type = #tpu.core_type<tc>, window_params = [{transform_indices = @transform_0, window_bounds = array<i64: 128, 32>}, {pipeline_mode = #tpu.pipeline_mode<synchronous>, transform_indices = @transform_1, window_bounds = array<i64: 10, 32>}, {pipeline_mode = #tpu.pipeline_mode<synchronous>, transform_indices = @transform_2, window_bounds = array<i64: 10, 1>}, {pipeline_mode = #tpu.pipeline_mode<synchronous>, transform_indices = @transform_3, window_bounds = array<i64: 10, 1>}, {pipeline_mode = #tpu.pipeline_mode<synchronous>, transform_indices = @transform_4, window_bounds = array<i64: 10, 1>}, {pipeline_mode = #tpu.pipeline_mode<synchronous>, transform_indices = @transform_5, window_bounds = array<i64: 1, 1>}, {transform_indices = @transform_6, window_bounds = array<i64: 1, 128>}]} {
    %c0 = arith.constant 0 : index
    %c0_0 = arith.constant 0 : index
    %0 = vector.load %arg2[%c0, %c0_0] : memref<10x32xf32, #tpu.memory_space<vmem>>, vector<10x32xf32>
    %c0_1 = arith.constant 0 : index
    %c0_2 = arith.constant 0 : index
    %1 = vector.load %arg1[%c0_1, %c0_2] : memref<128x32xf32, #tpu.memory_space<vmem>>, vector<128x32xf32>
    %cst = arith.constant dense<0.000000e+00> : vector<10x128xf32>
    %2 = tpu.matmul %0, %1, %cst {dimension_numbers = #tpu.dot_dimension_numbers<[1], [1], [0], [0], [0, 0, 1, 0], [], []>} : vector<10x32xf32>, vector<128x32xf32>, vector<10x128xf32> -> vector<10x128xf32>
    %c0_3 = arith.constant 0 : index
    %c0_4 = arith.constant 0 : index
    %3 = vector.load %arg3[%c0_3, %c0_4] : memref<10x1xf32, #tpu.memory_space<vmem>>, vector<10x1xf32>
    %4 = vector.broadcast %3 : vector<10x1xf32> to vector<10x128xf32>
    %5 = arith.mulf %2, %4 : vector<10x128xf32>
    %c0_5 = arith.constant 0 : index
    %c0_6 = arith.constant 0 : index
    %6 = vector.load %arg4[%c0_5, %c0_6] : memref<10x1xf32, #tpu.memory_space<vmem>>, vector<10x1xf32>
    %7 = vector.broadcast %6 : vector<10x1xf32> to vector<10x128xf32>
    %8 = arith.addf %5, %7 : vector<10x128xf32>
    %cst_7 = arith.constant 0.000000e+00 : f32
    %9 = vector.broadcast %cst_7 : f32 to vector<10x128xf32>
    %10 = arith.maximumf %8, %9 : vector<10x128xf32>
    %c0_8 = arith.constant 0 : index
    %c0_9 = arith.constant 0 : index
    %11 = vector.load %arg5[%c0_8, %c0_9] : memref<10x1xf32, #tpu.memory_space<vmem>>, vector<10x1xf32>
    %12 = vector.broadcast %11 : vector<10x1xf32> to vector<10x128xf32>
    %13 = arith.mulf %10, %12 : vector<10x128xf32>
    %cst_10 = arith.constant dense<0.000000e+00> : vector<128xf32>
    %14 = vector.multi_reduction <add>, %13, %cst_10 [0] : vector<10x128xf32> to vector<128xf32>
    %15 = vector.shape_cast %14 : vector<128xf32> to vector<1x128xf32>
    %c0_11 = arith.constant 0 : index
    %c0_12 = arith.constant 0 : index
    %16 = vector.load %arg6[%c0_11, %c0_12] : memref<1x1xf32, #tpu.memory_space<vmem>>, vector<1x1xf32>
    %17 = vector.broadcast %16 : vector<1x1xf32> to vector<1x128xf32>
    %18 = arith.addf %15, %17 : vector<1x128xf32>
    %19 = arith.negf %18 : vector<1x128xf32>
    %20 = math.exp %19 : vector<1x128xf32>
    %cst_13 = arith.constant 1.000000e+00 : f32
    %21 = vector.broadcast %cst_13 : f32 to vector<1x128xf32>
    %22 = arith.addf %21, %20 : vector<1x128xf32>
    %23 = arith.divf %21, %22 : vector<1x128xf32>
    %c0_14 = arith.constant 0 : index
    %c0_15 = arith.constant 0 : index
    %24 = vector.load %arg7[%c0_14, %c0_15] : memref<1x128xf32, #tpu.memory_space<vmem>>, vector<1x128xf32>
    tpu.vector_store %arg7[%c0_14, %c0_15], %23 {strides = array<i32>} : memref<1x128xf32, #tpu.memory_space<vmem>>, vector<1x128xf32>,
    return
  }
  func.func @transform_0(%arg0: i32) -> (i32, i32) {
    %c0_i32 = arith.constant 0 : i32
    %c0_i32_0 = arith.constant 0 : i32
    return %arg0, %c0_i32 : i32, i32
  }
  func.func @transform_1(%arg0: i32) -> (i32, i32) {
    %c0_i32 = arith.constant 0 : i32
    %c0_i32_0 = arith.constant 0 : i32
    %c0_i32_1 = arith.constant 0 : i32
    return %c0_i32, %c0_i32_0 : i32, i32
  }
  func.func @transform_2(%arg0: i32) -> (i32, i32) {
    %c0_i32 = arith.constant 0 : i32
    %c0_i32_0 = arith.constant 0 : i32
    %c0_i32_1 = arith.constant 0 : i32
    return %c0_i32, %c0_i32_0 : i32, i32
  }
  func.func @transform_3(%arg0: i32) -> (i32, i32) {
    %c0_i32 = arith.constant 0 : i32
    %c0_i32_0 = arith.constant 0 : i32
    %c0_i32_1 = arith.constant 0 : i32
    return %c0_i32, %c0_i32_0 : i32, i32
  }
  func.func @transform_4(%arg0: i32) -> (i32, i32) {
    %c0_i32 = arith.constant 0 : i32
    %c0_i32_0 = arith.constant 0 : i32
    %c0_i32_1 = arith.constant 0 : i32
    return %c0_i32, %c0_i32_0 : i32, i32
  }
  func.func @transform_5(%arg0: i32) -> (i32, i32) {
    %c0_i32 = arith.constant 0 : i32
    %c0_i32_0 = arith.constant 0 : i32
    %c0_i32_1 = arith.constant 0 : i32
    return %c0_i32, %c0_i32_0 : i32, i32
  }
  func.func @transform_6(%arg0: i32) -> (i32, i32) {
    %c0_i32 = arith.constant 0 : i32
    %c0_i32_0 = arith.constant 0 : i32
    return %c0_i32, %arg0 : i32, i32
  }
}

</mosaic_0001>

<llo_original>
// kernel: classify_forward.3
$region0: #{classify_forward.3}
  #allocation0 [shape = 'u32[]', space=smem, size = 0x4, offset = 0x4, fixed_abs, tag = 'smem constant byte address 0x4 - core index']
  #allocation1 [shape = 'u32[72,128]{1,0:T(1,128)}', space=vmem, size = 0x9000, scoped, tag = 'internal scratch']
  #allocation2 [shape = 'f32[1,1]{1,0:T(1,128)S(1)}', space=vmem, size = 0x200, scoped, tag = 'scoped memory for classify_forward.3']
  %s0 = inlined_call_operand.vmem [shape: f32[128,32], index: 0, kind: input, shape index: {}]
  %s1 = inlined_call_operand.vmem [shape: f32[10,32], index: 1, kind: input, shape index: {}]
  %s2 = inlined_call_operand.vmem [shape: f32[10,1], index: 2, kind: input, shape index: {}]
  %s3 = inlined_call_operand.vmem [shape: f32[10,1], index: 3, kind: input, shape index: {}]
  %s4 = inlined_call_operand.vmem [shape: f32[10,1], index: 4, kind: input, shape index: {}]
  %s5 = inlined_call_operand.<no memory space> [shape: f32[1,1], index: 5, kind: input, shape index: {}]
  %s6 = inlined_call_operand.vmem [shape: f32[1,128], index: 6, kind: output, shape index: {}]
  %s7 = sld [smem:[#allocation0]]
  $region34: #{classify_forward.3} parent=0
    _
  %s9 = ssub.s32 1, %s7
  %s10 = scalar_select 0, %s9, %s7
  %v11 = vstv %s5
  %12 = vst [vmem:[#allocation2] sm:$0x1] %v11
  // Predicated region
  $region2: #{classify_forward.3} parent=0 // pred_check
    _
  $region3: #{classify_forward.3} parent=0 // pred_check_branch
    %14 = sbr.rel (0) target = $region5
  $region4: #{classify_forward.3} parent=0 // pred_region
    _
  $region5: #{classify_forward.3} parent=0 // pred_fallthru
    _
  // Predicated region
  $region6: #{classify_forward.3} parent=0 // pred_check
    _
  $region7: #{classify_forward.3} parent=0 // pred_check_branch
    %16 = sbr.rel (0) target = $region9
  $region8: #{classify_forward.3} parent=0 // pred_region
    _
  $region9: #{classify_forward.3} parent=0 // pred_fallthru
    _
  // Predicated region
  $region10: #{classify_forward.3} parent=0 // pred_check
    _
  $region11: #{classify_forward.3} parent=0 // pred_check_branch
    %18 = sbr.rel (0) target = $region13
  $region12: #{classify_forward.3} parent=0 // pred_region
    _
  $region13: #{classify_forward.3} parent=0 // pred_fallthru
    _
  // Predicated region
  $region14: #{classify_forward.3} parent=0 // pred_check
    _
  $region15: #{classify_forward.3} parent=0 // pred_check_branch
    %20 = sbr.rel (0) target = $region17
  $region16: #{classify_forward.3} parent=0 // pred_region
    _
  $region17: #{classify_forward.3} parent=0 // pred_fallthru
    _
  // Predicated region
  $region18: #{classify_forward.3} parent=0 // pred_check
    _
  $region19: #{classify_forward.3} parent=0 // pred_check_branch
    %22 = sbr.rel (0) target = $region21
  $region20: #{classify_forward.3} parent=0 // pred_region
    _
  $region21: #{classify_forward.3} parent=0 // pred_fallthru
    _
  // Predicated region
  $region22: #{classify_forward.3} parent=0 // pred_check
    _
  $region23: #{classify_forward.3} parent=0 // pred_check_branch
    %24 = sbr.rel (0) target = $region25
  $region24: #{classify_forward.3} parent=0 // pred_region
    _
  $region25: #{classify_forward.3} parent=0 // pred_fallthru
    _
  %v25 = vld [vmem:[%s1] sm:$0xff]
  %v26 = vld [vmem:[%s1 + $0x8] sm:$0x3]
  %v27 = vld [vmem:[%s0] sm:$0xff]
  %v28 = vld [vmem:[%s0 + $0x8] sm:$0xff]
  %v29 = vld [vmem:[%s0 + $0x10] sm:$0xff]
  %v30 = vld [vmem:[%s0 + $0x18] sm:$0xff]
  %v31 = vld [vmem:[%s0 + $0x20] sm:$0xff]
  %v32 = vld [vmem:[%s0 + $0x28] sm:$0xff]
  %v33 = vld [vmem:[%s0 + $0x30] sm:$0xff]
  %v34 = vld [vmem:[%s0 + $0x38] sm:$0xff]
  %v35 = vld [vmem:[%s0 + $0x40] sm:$0xff]
  %v36 = vld [vmem:[%s0 + $0x48] sm:$0xff]
  %v37 = vld [vmem:[%s0 + $0x50] sm:$0xff]
  %v38 = vld [vmem:[%s0 + $0x58] sm:$0xff]
  %v39 = vld [vmem:[%s0 + $0x60] sm:$0xff]
  %v40 = vld [vmem:[%s0 + $0x68] sm:$0xff]
  %v41 = vld [vmem:[%s0 + $0x70] sm:$0xff]
  %v42 = vld [vmem:[%s0 + $0x78] sm:$0xff]
  %vm43 = vcmask 261120
  %v45 = vsel %vm43, %v25, 0
  %v48 = vsel %vm43, %v26, 0
  %v51 = vsel %vm43, %v27, 0
  %v54 = vsel %vm43, %v28, 0
  %v57 = vsel %vm43, %v29, 0
  %v60 = vsel %vm43, %v30, 0
  %v63 = vsel %vm43, %v31, 0
  %v66 = vsel %vm43, %v32, 0
  %v69 = vsel %vm43, %v33, 0
  %v72 = vsel %vm43, %v34, 0
  %v75 = vsel %vm43, %v35, 0
  %v78 = vsel %vm43, %v36, 0
  %v81 = vsel %vm43, %v37, 0
  %v84 = vsel %vm43, %v38, 0
  %v87 = vsel %vm43, %v39, 0
  %v90 = vsel %vm43, %v40, 0
  %v93 = vsel %vm43, %v41, 0
  %v96 = vsel %vm43, %v42, 0
  %98 = vmatpush.xpose.msra.mxu0 %v96
  %99 = vmatpush.xpose.msra.mxu0 %v93
  %100 = vmatpush.xpose.msra.mxu0 %v90
  %101 = vmatpush.xpose.msra.mxu0 %v87
  %102 = vmatpush.xpose.msra.mxu0 %v84
  %103 = vmatpush.xpose.msra.mxu0 %v81
  %104 = vmatpush.xpose.msra.mxu0 %v78
  %105 = vmatpush.xpose.msra.mxu0 %v75
  %106 = vmatpush.xpose.msra.mxu0 %v72
  %107 = vmatpush.xpose.msra.mxu0 %v69
  %108 = vmatpush.xpose.msra.mxu0 %v66
  %109 = vmatpush.xpose.msra.mxu0 %v63
  %110 = vmatpush.xpose.msra.mxu0 %v60
  %111 = vmatpush.xpose.msra.mxu0 %v57
  %112 = vmatpush.xpose.msra.mxu0 %v54
  %113 = vmatpush.xpose.msra.mxu0 %v51
  %114 = vmatmul.f32.gmra.mxu0 %v45
  %v115 = vpop.f32.mrf.mxu0
  %v116 = vadd.f32 0.0, %v115
  %117 = vmatmul.f32.gmra.mxu0 %v48
  %v118 = vpop.f32.mrf.mxu0
  %v119 = vadd.f32 0.0, %v118
  %120 = vdwg.mxu0
  %v121 = vld [vmem:[%s2] sm:$0xff]
  %v122 = vld [vmem:[%s2 + $0x8] sm:$0x3]
  %124 = vset.pattern.permute.xlu0 0
  %125 = vperm.xlu0 %124, %v121
  %v126 = vpop.permute.xlu0 %125
  %129 = vset.pattern.permute.xlu0 0
  %130 = vperm.xlu0 %129, %v122
  %v131 = vpop.permute.xlu0 %130
  %v133 = vmul.f32 %v116, %v126
  %v134 = vmul.f32 %v119, %v131
  %v135 = vld [vmem:[%s3] sm:$0xff]
  %v136 = vld [vmem:[%s3 + $0x8] sm:$0x3]
  %138 = vset.pattern.permute.xlu0 0
  %139 = vperm.xlu0 %138, %v135
  %v140 = vpop.permute.xlu0 %139
  %143 = vset.pattern.permute.xlu0 0
  %144 = vperm.xlu0 %143, %v136
  %v145 = vpop.permute.xlu0 %144
  %v147 = vadd.f32 %v133, %v140
  %v148 = vadd.f32 %v134, %v145
  %v149 = vmax.f32 %v147, 0.0
  %v150 = vmax.f32 %v148, 0.0
  %v151 = vld [vmem:[%s4] sm:$0xff]
  %v152 = vld [vmem:[%s4 + $0x8] sm:$0x3]
  %154 = vset.pattern.permute.xlu0 0
  %155 = vperm.xlu0 %154, %v151
  %v156 = vpop.permute.xlu0 %155
  %159 = vset.pattern.permute.xlu0 0
  %160 = vperm.xlu0 %159, %v152
  %v161 = vpop.permute.xlu0 %160
  %v163 = vmul.f32 %v149, %v156
  %v164 = vmul.f32 %v150, %v161
  %vm165 = vcmask 1041408
  %v166 = vsel %vm165, %v164, 0.0
  %v167 = vadd.f32 %v163, %v166
  %v168 = vrot.slane %v167, 4
  %v169 = vadd.f32 %v167, %v168
  %v170 = vrot.slane %v169, 2
  %v171 = vadd.f32 %v169, %v170
  %v172 = vrot.slane %v171, 1
  %v173 = vadd.f32 %v171, %v172
  %v174 = vld [vmem:[#allocation2] sm:$0x1]
  %176 = vset.pattern.permute.xlu0 0
  %177 = vperm.xlu0 %176, %v174
  %v178 = vpop.permute.xlu0 %177
  %v180 = vperm.slane %v178, 0
  %v181 = vadd.f32 %v173, %v180
  %v182 = vxor.u32 %v181, 2147483648
  %v183 = vmul.f32 %v182, 1.442695
  %v184 = vpow.pop %v183
  %v185 = vadd.f32 %v184, 1.0
  %v186 = vrcp.pop %v185
  %v187 = vmul.f32 %v185, %v186
  %v188 = vsub.f32 1.0, %v187
  %v189 = vmul.f32 %v186, %v188
  %v190 = vadd.f32 %v186, %v189
  %vm191 = vweird.f32 %v185
  %vm192 = vweird.f32 %v186
  %vm193 = vmor %vm191, %vm192
  %v194 = vsel %vm193, %v186, %v190
  %v195 = vand.u32 2147483647, %v185
  %vm196 = vcmp.eq.f32.partialorder %v195, 8.507059e+37
  %v197 = vand.u32 %v185, 2147483648
  %v198 = vor.u32 1.1754944e-38, %v197
  %v199 = vsel %vm196, %v198, %v194
  %v200 = vmul.f32 1.0, %v199
  %201 = vst [vmem:[%s6] sm:$0x1] %v200
  // Predicated region
  $region26: #{classify_forward.3} parent=0 // pred_check
    _
  $region27: #{classify_forward.3} parent=0 // pred_check_branch
    %203 = sbr.rel (0) target = $region29
  $region28: #{classify_forward.3} parent=0 // pred_region
    _
  $region29: #{classify_forward.3} parent=0 // pred_fallthru
    _
  // Predicated region
  $region30: #{classify_forward.3} parent=0 // pred_check
    _
  $region31: #{classify_forward.3} parent=0 // pred_check_branch
    %205 = sbr.rel (0) target = $region33
  $region32: #{classify_forward.3} parent=0 // pred_region
    _
  $region33: #{classify_forward.3} parent=0 // pred_fallthru
    _

// kernel: classify_forward.2
$region0: #{classify_forward.2}
  #allocation0 [shape = 'u32[]', space=smem, size = 0x4, offset = 0x4, fixed_abs, tag = 'smem constant byte address 0x4 - core index']
  #allocation1 [shape = 'u32[72,128]{1,0:T(1,128)}', space=vmem, size = 0x9000, scoped, tag = 'internal scratch']
  %s0 = inlined_call_operand.vmem [shape: f32[128,32], index: 0, kind: input, shape index: {}]
  %s1 = inlined_call_operand.vmem [shape: f32[10,32], index: 1, kind: input, shape index: {}]
  %s2 = inlined_call_operand.vmem [shape: f32[10,1], index: 2, kind: output, shape index: {0}]
  %s3 = inlined_call_operand.vmem [shape: f32[10,1], index: 3, kind: output, shape index: {1}]
  %4 = xla_tuple %s2, %s3
  %s5 = sld [smem:[#allocation0]]
  $region30: #{classify_forward.2} parent=0
    _
  %s7 = ssub.s32 1, %s5
  %s8 = scalar_select 0, %s7, %s5
  // Predicated region
  $region2: #{classify_forward.2} parent=0 // pred_check
    _
  $region3: #{classify_forward.2} parent=0 // pred_check_branch
    %10 = sbr.rel (0) target = $region5
  $region4: #{classify_forward.2} parent=0 // pred_region
    _
  $region5: #{classify_forward.2} parent=0 // pred_fallthru
    _
  // Predicated region
  $region6: #{classify_forward.2} parent=0 // pred_check
    _
  $region7: #{classify_forward.2} parent=0 // pred_check_branch
    %12 = sbr.rel (0) target = $region9
  $region8: #{classify_forward.2} parent=0 // pred_region
    _
  $region9: #{classify_forward.2} parent=0 // pred_fallthru
    _
  %p13 = scmp.eq.s32.totalorder 0, 0
  // Predicated region
  $region10: #{classify_forward.2} parent=0 // pred_check
    %p14 = pneg %p13
  $region11: #{classify_forward.2} parent=0 // pred_check_branch
    %16 = sbr.rel (%p14) target = $region13
  $region12: #{classify_forward.2} parent=0 // pred_region
    %vm17 = vcmask 7168
    %18 = vst.msk [vmem:[%s2] sm:$0xff] %vm17, 0.0
    %vm19 = vcmask 1024
    %20 = vst.msk [vmem:[%s2 + $0x8] sm:$0x3] %vm19, 0.0
    %21 = vst.msk [vmem:[%s3] sm:$0xff] %vm17, 0.0
    %22 = vst.msk [vmem:[%s3 + $0x8] sm:$0x3] %vm19, 0.0
  $region13: #{classify_forward.2} parent=0 // pred_fallthru
    _
  %v23 = vld [vmem:[%s1] sm:$0xff]
  %v24 = vld [vmem:[%s1 + $0x8] sm:$0x3]
  %v25 = vld [vmem:[%s0] sm:$0xff]
  %v26 = vld [vmem:[%s0 + $0x8] sm:$0xff]
  %v27 = vld [vmem:[%s0 + $0x10] sm:$0xff]
  %v28 = vld [vmem:[%s0 + $0x18] sm:$0xff]
  %v29 = vld [vmem:[%s0 + $0x20] sm:$0xff]
  %v30 = vld [vmem:[%s0 + $0x28] sm:$0xff]
  %v31 = vld [vmem:[%s0 + $0x30] sm:$0xff]
  %v32 = vld [vmem:[%s0 + $0x38] sm:$0xff]
  %v33 = vld [vmem:[%s0 + $0x40] sm:$0xff]
  %v34 = vld [vmem:[%s0 + $0x48] sm:$0xff]
  %v35 = vld [vmem:[%s0 + $0x50] sm:$0xff]
  %v36 = vld [vmem:[%s0 + $0x58] sm:$0xff]
  %v37 = vld [vmem:[%s0 + $0x60] sm:$0xff]
  %v38 = vld [vmem:[%s0 + $0x68] sm:$0xff]
  %v39 = vld [vmem:[%s0 + $0x70] sm:$0xff]
  %v40 = vld [vmem:[%s0 + $0x78] sm:$0xff]
  %vm41 = vcmask 261120
  %v43 = vsel %vm41, %v23, 0
  %v46 = vsel %vm41, %v24, 0
  %v49 = vsel %vm41, %v25, 0
  %v52 = vsel %vm41, %v26, 0
  %v55 = vsel %vm41, %v27, 0
  %v58 = vsel %vm41, %v28, 0
  %v61 = vsel %vm41, %v29, 0
  %v64 = vsel %vm41, %v30, 0
  %v67 = vsel %vm41, %v31, 0
  %v70 = vsel %vm41, %v32, 0
  %v73 = vsel %vm41, %v33, 0
  %v76 = vsel %vm41, %v34, 0
  %v79 = vsel %vm41, %v35, 0
  %v82 = vsel %vm41, %v36, 0
  %v85 = vsel %vm41, %v37, 0
  %v88 = vsel %vm41, %v38, 0
  %v91 = vsel %vm41, %v39, 0
  %v94 = vsel %vm41, %v40, 0
  %96 = vmatpush.xpose.msra.mxu0 %v94
  %97 = vmatpush.xpose.msra.mxu0 %v91
  %98 = vmatpush.xpose.msra.mxu0 %v88
  %99 = vmatpush.xpose.msra.mxu0 %v85
  %100 = vmatpush.xpose.msra.mxu0 %v82
  %101 = vmatpush.xpose.msra.mxu0 %v79
  %102 = vmatpush.xpose.msra.mxu0 %v76
  %103 = vmatpush.xpose.msra.mxu0 %v73
  %104 = vmatpush.xpose.msra.mxu0 %v70
  %105 = vmatpush.xpose.msra.mxu0 %v67
  %106 = vmatpush.xpose.msra.mxu0 %v64
  %107 = vmatpush.xpose.msra.mxu0 %v61
  %108 = vmatpush.xpose.msra.mxu0 %v58
  %109 = vmatpush.xpose.msra.mxu0 %v55
  %110 = vmatpush.xpose.msra.mxu0 %v52
  %111 = vmatpush.xpose.msra.mxu0 %v49
  %112 = vmatmul.f32.gmra.mxu0 %v43
  %v113 = vpop.f32.mrf.mxu0
  %v114 = vadd.f32 0.0, %v113
  %115 = vmatmul.f32.gmra.mxu0 %v46
  %v116 = vpop.f32.mrf.mxu0
  %v117 = vadd.f32 0.0, %v116
  %118 = vdwg.mxu0
  %s119 = smul.u32 0, 128
  %v120 = vlaneseq
  %v121 = vand.u32 %v120, 127
  %v122 = vstv %s119
  %v123 = vadd.s32 %v122, %v121
  %vm124 = vcmp.lt.s32.totalorder %v123, 8
  %v125 = vsel %vm124, 1, 0
  %vm126 = vcmp.eq.s32.totalorder %v125, 1
  %v127 = vsel %vm126, %v114, 0.0
  %v128 = vsel %vm126, %v117, 0.0
  %v129 = vld [vmem:[%s2] sm:$0xff]
  %v130 = vld [vmem:[%s2 + $0x8] sm:$0x3]
  %131 = vadd.xlane.f32.xlu0 %v127
  %v132 = vpop.xlane.xlu0 %131
  %vm133 = vcmask 1041408
  %v134 = vsel %vm133, %v128, 0.0
  %135 = vadd.xlane.f32.xlu0 %v134
  %v136 = vpop.xlane.xlu0 %135
  %v137 = vadd.f32 %v129, %v132
  %v138 = vadd.f32 %v130, %v136
  %vm139 = vcmask 7168
  %140 = vst.msk [vmem:[%s2] sm:$0xff] %vm139, %v137
  %vm141 = vcmask 1024
  %142 = vst.msk [vmem:[%s2 + $0x8] sm:$0x3] %vm141, %v138
  %v143 = vld [vmem:[%s3] sm:$0xff]
  %v144 = vld [vmem:[%s3 + $0x8] sm:$0x3]
  %v145 = vmul.f32 %v127, %v127
  %v146 = vmul.f32 %v128, %v128
  %147 = vadd.xlane.f32.xlu0 %v145
  %v148 = vpop.xlane.xlu0 %147
  %v149 = vsel %vm133, %v146, 0.0
  %150 = vadd.xlane.f32.xlu0 %v149
  %v151 = vpop.xlane.xlu0 %150
  %v152 = vadd.f32 %v143, %v148
  %v153 = vadd.f32 %v144, %v151
  %154 = vst.msk [vmem:[%s3] sm:$0xff] %vm139, %v152
  %155 = vst.msk [vmem:[%s3 + $0x8] sm:$0x3] %vm141, %v153
  // Predicated region
  $region14: #{classify_forward.2} parent=0 // pred_check
    _
  $region15: #{classify_forward.2} parent=0 // pred_check_branch
    %157 = sbr.rel (0) target = $region17
  $region16: #{classify_forward.2} parent=0 // pred_region
    _
  $region17: #{classify_forward.2} parent=0 // pred_fallthru
    _
  // Predicated region
  $region18: #{classify_forward.2} parent=0 // pred_check
    _
  $region19: #{classify_forward.2} parent=0 // pred_check_branch
    %159 = sbr.rel (0) target = $region21
  $region20: #{classify_forward.2} parent=0 // pred_region
    _
  $region21: #{classify_forward.2} parent=0 // pred_fallthru
    _
  // Predicated region
  $region22: #{classify_forward.2} parent=0 // pred_check
    _
  $region23: #{classify_forward.2} parent=0 // pred_check_branch
    %161 = sbr.rel (0) target = $region25
  $region24: #{classify_forward.2} parent=0 // pred_region
    _
  $region25: #{classify_forward.2} parent=0 // pred_fallthru
    _
  // Predicated region
  $region26: #{classify_forward.2} parent=0 // pred_check
    _
  $region27: #{classify_forward.2} parent=0 // pred_check_branch
    %163 = sbr.rel (0) target = $region29
  $region28: #{classify_forward.2} parent=0 // pred_region
    _
  $region29: #{classify_forward.2} parent=0 // pred_fallthru
    _

</llo_original>
